<compile_context>
chip_gen: v7x
topology: tpu7x:2x2x1
jax: 0.10.0
libtpu: 0.0.40
codegen_flags: <defaults>
</compile_context>

<pallas_src>
import functools

import jax
import jax.numpy as jnp
import numpy as np
from jax.experimental import pallas as pl
from jax.experimental.pallas import tpu as pltpu

# --- deterministic "model" constants (the module's model carries start/end idx)
START_IDX = 0
END_IDX = 9
VOCAB = 10

LANE = 128


def _round_up(x, m):
    return (x + m - 1) // m * m


# ------------------------------------------------------------------
# Fused SCST loss kernel over one lane-dense (T, tile_n) column tile.
#   partial[0, n] = sum_t( logprob[t, n] * reward[n] * mask[t, n] )
#   mask[0, :] = 1 ;  mask[t, :] = (seq[t-1, :] != end_idx)
# Negation and the /N mean are folded into the (tiny) JAX epilogue.
# ------------------------------------------------------------------
def _nscst_loss_kernel(seqs_ref, logp_ref, reward_ref, partial_ref, *, end_idx):
    seqs = seqs_ref[...]                        # (T, tn) int32
    logp = logp_ref[...]                        # (T, tn) f32
    rew = reward_ref[...]                       # (1, tn) f32

    # shift-by-one along the time (sublane) axis; row 0 is forced "keep",
    # which also neutralizes the wrap-around of the roll.
    prev = pltpu.roll(seqs, shift=1, axis=0)    # prev[t] = seq[t-1]
    rows = jax.lax.broadcasted_iota(jnp.int32, seqs.shape, 0)
    keep = (rows == 0) | (prev != end_idx)      # bool (T, tn)

    p = logp * rew                              # reward broadcast over sublanes
    contrib = jnp.where(keep, p, 0.0)
    partial_ref[...] = jnp.sum(contrib, axis=0, keepdims=True)   # (1, tn)


# ------------------------------------------------------------------
# NScstWrapper.nscst forward
# ------------------------------------------------------------------
@functools.partial(jax.jit, static_argnames=("end_idx", "tile_n"))
def nscst_forward(sampled_score, sampled_seqs, sampled_logprobs,
                  *, end_idx=END_IDX, tile_n=512):
    """sampled_score: (B, sample_n) f32, sampled_seqs: (N, T) int,
    sampled_logprobs: (N, T) f32, with N = B * sample_n."""
    B, S = sampled_score.shape
    N, T = sampled_seqs.shape
    assert N == B * S, "N must equal batch * sample_n"
    if S < 2:
        raise ValueError("sample_n must be > 1 for the NSCST baseline")
    assert tile_n % LANE == 0

    # --- reward (tiny (B, sample_n) math; original module does this in numpy) ---
    score_f = sampled_score.astype(jnp.float32)
    baseline = (jnp.sum(score_f, axis=1, keepdims=True) - score_f) / (S - 1)
    reward_bs = score_f - baseline                         # (B, S)
    reward = reward_bs.reshape(-1)                         # output['reward']
    score = score_f.reshape(-1)                            # output['score']

    # --- lane-dense layout: put N on the 128-lane axis ---
    if N <= tile_n:
        tile = N if N <= LANE else _round_up(N, LANE)
        n_pad = tile
    else:
        tile = tile_n
        n_pad = _round_up(N, tile)
    pad = n_pad - N

    seqs_t = jnp.transpose(sampled_seqs.astype(jnp.int32))       # (T, N)
    logp_t = jnp.transpose(sampled_logprobs.astype(jnp.float32)) # (T, N)
    reward_row = reward.reshape(1, N)                            # (1, N)
    if pad:
        # zero-padded logp AND reward => padded columns contribute exactly 0
        seqs_t = jnp.pad(seqs_t, ((0, 0), (0, pad)))
        logp_t = jnp.pad(logp_t, ((0, 0), (0, pad)))
        reward_row = jnp.pad(reward_row, ((0, 0), (0, pad)))

    num_tiles = n_pad // tile
    kernel = functools.partial(_nscst_loss_kernel, end_idx=end_idx)
    partials = pl.pallas_call(
        kernel,
        out_shape=jax.ShapeDtypeStruct((1, n_pad), jnp.float32),
        grid=(num_tiles,),
        in_specs=[
            pl.BlockSpec((T, tile), lambda j: (0, j)),   # seqs  (T, N_pad)
            pl.BlockSpec((T, tile), lambda j: (0, j)),   # logp  (T, N_pad)
            pl.BlockSpec((1, tile), lambda j: (0, j)),   # reward (1, N_pad)
        ],
        out_specs=pl.BlockSpec((1, tile), lambda j: (0, j)),
        compiler_params=pltpu.CompilerParams(
            dimension_semantics=("parallel",)),
    )(seqs_t, logp_t, reward_row)

    loss = -jnp.sum(partials) / N                         # output['loss']
    return {"reward": reward, "score": score, "loss": loss}


# ------------------------------------------------------------------
# Pure-numpy reference mirroring the PyTorch code
# ------------------------------------------------------------------
def _reference(sampled_score, sampled_seqs, sampled_logprobs, end_idx=END_IDX):
    score = np.asarray(sampled_score, np.float64)
    seqs = np.asarray(sampled_seqs)
    logp = np.asarray(sampled_logprobs, np.float64)
    S = score.shape[1]
    baseline = (score.sum(1, keepdims=True) - score) / (S - 1)
    reward = (score - baseline).reshape(-1)
    rew_rep = np.repeat(reward[:, None], seqs.shape[-1], 1)
    mask = (seqs != end_idx).astype(np.float64)
    mask = np.concatenate([np.ones((mask.shape[0], 1)), mask[:, :-1]], 1)
    loss = (-logp * rew_rep * mask).sum(1).mean()
    return reward, score.reshape(-1), loss


def _check(out, ref, loss_atol, loss_rtol):
    ref_reward, ref_score, ref_loss = ref
    assert np.allclose(np.asarray(out["reward"]), ref_reward, atol=1e-5), "reward mismatch"
    assert np.allclose(np.asarray(out["score"]), ref_score, atol=1e-5), "score mismatch"
    assert np.allclose(float(out["loss"]), ref_loss, atol=loss_atol, rtol=loss_rtol), \
        f"loss mismatch: {float(out['loss'])} vs {ref_loss}"


if __name__ == "__main__":
    key = jax.random.PRNGKey(0)

    # --- small case (module-typical toy shapes): single tile path ---
    B, sample_n, T = 2, 4, 8
    N = B * sample_n
    k_score, k_seq, k_logp, key = jax.random.split(key, 4)
    sampled_score = jax.random.uniform(k_score, (B, sample_n), jnp.float32)
    sampled_seqs = jax.random.randint(k_seq, (N, T), 0, VOCAB, jnp.int32)
    sampled_logprobs = -jax.random.uniform(k_logp, (N, T), jnp.float32)

    out = nscst_forward(sampled_score, sampled_seqs, sampled_logprobs)
    jax.block_until_ready(out)
    _check(out,
           _reference(np.asarray(sampled_score), np.asarray(sampled_seqs),
                      np.asarray(sampled_logprobs)),
           loss_atol=1e-5, loss_rtol=1e-5)

    # --- larger case: exercises padding + multi-tile "parallel" grid path ---
    B2, sample_n2, T2 = 96, 8, 16
    N2 = B2 * sample_n2                      # 768 -> padded to 1024, 2 tiles
    k_score2, k_seq2, k_logp2, key = jax.random.split(key, 4)
    score2 = jax.random.uniform(k_score2, (B2, sample_n2), jnp.float32)
    seqs2 = jax.random.randint(k_seq2, (N2, T2), 0, VOCAB, jnp.int32)
    logp2 = -jax.random.uniform(k_logp2, (N2, T2), jnp.float32)

    out2 = nscst_forward(score2, seqs2, logp2)
    jax.block_until_ready(out2)
    _check(out2,
           _reference(np.asarray(score2), np.asarray(seqs2), np.asarray(logp2)),
           loss_atol=1e-3, loss_rtol=1e-3)

    print("KERNEL_OK")
</pallas_src>

<mosaic_0001>
module attributes {stable_mosaic.version = 11 : i64} {
  func.func @_nscst_loss_kernel(%arg0: i32, %arg1: memref<8x8xi32, #tpu.memory_space<vmem>>, %arg2: memref<8x8xf32, #tpu.memory_space<vmem>>, %arg3: memref<1x8xf32, #tpu.memory_space<vmem>>, %arg4: memref<1x8xf32, #tpu.memory_space<vmem>>) attributes {dimension_semantics = [#tpu.dimension_semantics<parallel>], iteration_bounds = array<i64: 1>, scalar_prefetch = 0 : i64, scratch_operands = 0 : i64, tpu.core_type = #tpu.core_type<tc>, window_params = [{transform_indices = @transform_0, window_bounds = array<i64: 8, 8>}, {transform_indices = @transform_1, window_bounds = array<i64: 8, 8>}, {transform_indices = @transform_2, window_bounds = array<i64: 1, 8>}, {transform_indices = @transform_3, window_bounds = array<i64: 1, 8>}]} {
    %c0 = arith.constant 0 : index
    %c0_0 = arith.constant 0 : index
    %0 = vector.load %arg1[%c0, %c0_0] : memref<8x8xi32, #tpu.memory_space<vmem>>, vector<8x8xi32>
    %c0_1 = arith.constant 0 : index
    %c0_2 = arith.constant 0 : index
    %1 = vector.load %arg2[%c0_1, %c0_2] : memref<8x8xf32, #tpu.memory_space<vmem>>, vector<8x8xf32>
    %c0_3 = arith.constant 0 : index
    %c0_4 = arith.constant 0 : index
    %2 = vector.load %arg3[%c0_3, %c0_4] : memref<1x8xf32, #tpu.memory_space<vmem>>, vector<1x8xf32>
    %c1_i32 = arith.constant 1 : i32
    %3 = tpu.dynamic_rotate %0 by %c1_i32 dim 0 : vector<8x8xi32>, i32 -> vector<8x8xi32>
    %4 = tpu.iota {dimensions = array<i32: 0>} : vector<8x8xi32>
    %c0_i32 = arith.constant 0 : i32
    %5 = vector.broadcast %c0_i32 : i32 to vector<8x8xi32>
    %6 = arith.cmpi eq, %4, %5 : vector<8x8xi32>
    %c9_i32 = arith.constant 9 : i32
    %7 = vector.broadcast %c9_i32 : i32 to vector<8x8xi32>
    %8 = arith.cmpi ne, %3, %7 : vector<8x8xi32>
    %9 = arith.ori %6, %8 : vector<8x8xi1>
    %10 = vector.broadcast %2 : vector<1x8xf32> to vector<8x8xf32>
    %11 = arith.mulf %1, %10 : vector<8x8xf32>
    %cst = arith.constant 0.000000e+00 : f32
    %12 = vector.broadcast %cst : f32 to vector<8x8xf32>
    %13 = arith.select %9, %11, %12 : vector<8x8xi1>, vector<8x8xf32>
    %cst_5 = arith.constant dense<0.000000e+00> : vector<8xf32>
    %14 = vector.multi_reduction <add>, %13, %cst_5 [0] : vector<8x8xf32> to vector<8xf32>
    %15 = vector.shape_cast %14 : vector<8xf32> to vector<1x8xf32>
    %c0_6 = arith.constant 0 : index
    %c0_7 = arith.constant 0 : index
    %16 = vector.load %arg4[%c0_6, %c0_7] : memref<1x8xf32, #tpu.memory_space<vmem>>, vector<1x8xf32>
    tpu.vector_store %arg4[%c0_6, %c0_7], %15 {strides = array<i32>} : memref<1x8xf32, #tpu.memory_space<vmem>>, vector<1x8xf32>,
    return
  }
  func.func @transform_0(%arg0: i32) -> (i32, i32) {
    %c0_i32 = arith.constant 0 : i32
    %c0_i32_0 = arith.constant 0 : i32
    return %c0_i32, %arg0 : i32, i32
  }
  func.func @transform_1(%arg0: i32) -> (i32, i32) {
    %c0_i32 = arith.constant 0 : i32
    %c0_i32_0 = arith.constant 0 : i32
    return %c0_i32, %arg0 : i32, i32
  }
  func.func @transform_2(%arg0: i32) -> (i32, i32) {
    %c0_i32 = arith.constant 0 : i32
    %c0_i32_0 = arith.constant 0 : i32
    return %c0_i32, %arg0 : i32, i32
  }
  func.func @transform_3(%arg0: i32) -> (i32, i32) {
    %c0_i32 = arith.constant 0 : i32
    %c0_i32_0 = arith.constant 0 : i32
    return %c0_i32, %arg0 : i32, i32
  }
}

</mosaic_0001>

<llo_original>
// kernel: nscst_forward.1
$region0: #{nscst_forward.1}
  #allocation0 [shape = 'u32[]', space=smem, size = 0x4, offset = 0x4, fixed_abs, tag = 'smem constant byte address 0x4 - core index']
  #allocation1 [shape = 'u32[144,128]{1,0:T(1,128)}', space=vmem, size = 0x12000, scoped, tag = 'internal scratch']
  %s0 = inlined_call_operand.vmem [shape: s32[8,8], index: 0, kind: input, shape index: {}]
  %s1 = inlined_call_operand.vmem [shape: f32[8,8], index: 1, kind: input, shape index: {}]
  %s2 = inlined_call_operand.vmem [shape: f32[1,8], index: 2, kind: input, shape index: {}]
  %s3 = inlined_call_operand.vmem [shape: f32[1,8], index: 3, kind: output, shape index: {}]
  %s4 = sld [smem:[#allocation0]]
  $region22: #{nscst_forward.1} parent=0
    _
  %s6 = ssub.s32 1, %s4
  %s7 = scalar_select 0, %s6, %s4
  // Predicated region
  $region2: #{nscst_forward.1} parent=0 // pred_check
    _
  $region3: #{nscst_forward.1} parent=0 // pred_check_branch
    %9 = sbr.rel (0) target = $region5
  $region4: #{nscst_forward.1} parent=0 // pred_region
    _
  $region5: #{nscst_forward.1} parent=0 // pred_fallthru
    _
  // Predicated region
  $region6: #{nscst_forward.1} parent=0 // pred_check
    _
  $region7: #{nscst_forward.1} parent=0 // pred_check_branch
    %11 = sbr.rel (0) target = $region9
  $region8: #{nscst_forward.1} parent=0 // pred_region
    _
  $region9: #{nscst_forward.1} parent=0 // pred_fallthru
    _
  // Predicated region
  $region10: #{nscst_forward.1} parent=0 // pred_check
    _
  $region11: #{nscst_forward.1} parent=0 // pred_check_branch
    %13 = sbr.rel (0) target = $region13
  $region12: #{nscst_forward.1} parent=0 // pred_region
    _
  $region13: #{nscst_forward.1} parent=0 // pred_fallthru
    _
  %v14 = vld [vmem:[%s0] sm:$0xff]
  %v15 = vld [vmem:[%s1] sm:$0xff]
  %v16 = vld [vmem:[%s2] sm:$0x1]
  %v17 = vrot.slane %v14, 7
  %v18 = vlaneseq
  %v19 = vshrl.u32 %v18, 7
  %vm20 = vcmp.eq.s32.totalorder %v19, 0
  %vm21 = vcmp.ne.s32.totalorder %v17, 9
  %vm22 = vmor %vm20, %vm21
  %v24 = vlaneseq
  %v25 = vshrl.u32 %v24, 7
  %v26 = vsub.s32 0, %v25
  %v27 = vrot.slane %v16, %v26
  %v29 = vmul.f32 %v15, %v27
  %v30 = vsel %vm22, %v29, 0.0
  %vm31 = vcmask 64512
  %v32 = vsel %vm31, %v30, 0.0
  %v33 = vrot.slane %v32, 4
  %v34 = vadd.f32 %v32, %v33
  %v35 = vrot.slane %v34, 2
  %v36 = vadd.f32 %v34, %v35
  %v37 = vrot.slane %v36, 1
  %v38 = vadd.f32 %v36, %v37
  %vm39 = vcmask 57344
  %40 = vst.msk [vmem:[%s3] sm:$0x1] %vm39, %v38
  // Predicated region
  $region14: #{nscst_forward.1} parent=0 // pred_check
    _
  $region15: #{nscst_forward.1} parent=0 // pred_check_branch
    %42 = sbr.rel (0) target = $region17
  $region16: #{nscst_forward.1} parent=0 // pred_region
    _
  $region17: #{nscst_forward.1} parent=0 // pred_fallthru
    _
  // Predicated region
  $region18: #{nscst_forward.1} parent=0 // pred_check
    _
  $region19: #{nscst_forward.1} parent=0 // pred_check_branch
    %44 = sbr.rel (0) target = $region21
  $region20: #{nscst_forward.1} parent=0 // pred_region
    _
  $region21: #{nscst_forward.1} parent=0 // pred_fallthru
    _

</llo_original>
